<compile_context>
chip_gen: v7x
topology: tpu7x:2x2x1
jax: 0.10.0
libtpu: 0.0.40
codegen_flags: <defaults>
</compile_context>

<pallas_src>
import jax
import jax.numpy as jnp
from jax.experimental import pallas as pl
from jax.experimental.pallas import tpu as pltpu


def _round_up(n, m):
    return ((n + m - 1) // m) * m


def vae_kernel(x_ref,
               w1_ref, b1_ref,
               w2_ref, b2_ref,
               w3_ref, b3_ref,
               w4_ref, b4_ref,
               o_ref):
    cdt = w1_ref.dtype  # compute dtype of the matmul operands (bf16 by default)
    x = x_ref[...]
    # encoder
    h = jnp.dot(x, w1_ref[...], preferred_element_type=jnp.float32) + b1_ref[...]
    h = jnp.maximum(h, 0.0).astype(cdt)
    h = jnp.dot(h, w2_ref[...], preferred_element_type=jnp.float32) + b2_ref[...]
    h = jnp.maximum(h, 0.0).astype(cdt)
    # decoder
    h = jnp.dot(h, w3_ref[...], preferred_element_type=jnp.float32) + b3_ref[...]
    h = jnp.maximum(h, 0.0).astype(cdt)
    out = jnp.dot(h, w4_ref[...], preferred_element_type=jnp.float32) + b4_ref[...]
    o_ref[...] = out.astype(o_ref.dtype)


def vae_forward(x, params, *, batch_tile=512, compute_dtype=jnp.bfloat16):
    """x: (B, window_size) float32. params: dict of (w1,b1,...,w4,b4).

    Returns (B, window_size) float32.
    """
    B, ws = x.shape
    LANE = 128
    ws_pad = _round_up(ws, LANE)

    # MXU-aligned batch tile; clamp for tiny batches so we do not over-pad.
    bt = min(batch_tile, _round_up(B, 8))
    B_pad = _round_up(B, bt)
    grid = (B_pad // bt,)

    def pad_cast(a, shape, dtype):
        out = jnp.zeros(shape, dtype)
        return out.at[: a.shape[0], : a.shape[1]].set(a.astype(dtype))

    # Inputs / weights in bf16 (f32 accumulation in-kernel); biases in f32.
    # Zero padding keeps the math exact (zero rows/cols contribute nothing,
    # ReLU(0) = 0); the extra output columns are sliced off below.
    x_p = pad_cast(x, (B_pad, ws_pad), compute_dtype)
    w1 = pad_cast(params["w1"], (ws_pad, 128), compute_dtype)   # zero rows
    b1 = params["b1"].astype(jnp.float32)                       # (1, 128)
    w2 = pad_cast(params["w2"], (128, 128), compute_dtype)      # zero cols
    b2 = pad_cast(params["b2"], (1, 128), jnp.float32)
    w3 = pad_cast(params["w3"], (128, 128), compute_dtype)      # zero rows
    b3 = params["b3"].astype(jnp.float32)                       # (1, 128)
    w4 = pad_cast(params["w4"], (128, ws_pad), compute_dtype)   # zero cols
    b4 = pad_cast(params["b4"], (1, ws_pad), jnp.float32)

    def full_spec(arr):
        # whole (small) parameter resident in VMEM for every grid step
        return pl.BlockSpec(arr.shape, lambda i: (0, 0))

    out = pl.pallas_call(
        vae_kernel,
        out_shape=jax.ShapeDtypeStruct((B_pad, ws_pad), jnp.float32),
        grid=grid,
        in_specs=[
            pl.BlockSpec((bt, ws_pad), lambda i: (i, 0)),  # x tile
            full_spec(w1), full_spec(b1),
            full_spec(w2), full_spec(b2),
            full_spec(w3), full_spec(b3),
            full_spec(w4), full_spec(b4),
        ],
        out_specs=pl.BlockSpec((bt, ws_pad), lambda i: (i, 0)),
        compiler_params=pltpu.CompilerParams(
            dimension_semantics=("parallel",),  # batch axis shards across TCs
        ),
    )(x_p, w1, b1, w2, b2, w3, b3, w4, b4)

    return out[:B, :ws]


def init_params(key, window_size):
    """Deterministic init matching PyTorch Linear shapes (stored transposed)."""
    def linear(key, fan_in, fan_out):
        kw, kb = jax.random.split(key)
        bound = 1.0 / jnp.sqrt(fan_in)
        w = jax.random.uniform(kw, (fan_in, fan_out), jnp.float32, -bound, bound)
        b = jax.random.uniform(kb, (1, fan_out), jnp.float32, -bound, bound)
        return w, b

    k1, k2, k3, k4 = jax.random.split(key, 4)
    w1, b1 = linear(k1, window_size, 128)
    w2, b2 = linear(k2, 128, 64)
    w3, b3 = linear(k3, 64, 128)
    w4, b4 = linear(k4, 128, window_size)
    return {"w1": w1, "b1": b1, "w2": w2, "b2": b2,
            "w3": w3, "b3": b3, "w4": w4, "b4": b4}


def vae_forward_ref(x, p, dtype=jnp.float32):
    """Pure-JAX reference. dtype controls matmul-operand precision so we can
    check the bf16 kernel against a same-precision reference (tight tol) and
    against full f32 (loose tol)."""
    cast = lambda a: a.astype(dtype)
    h = jnp.maximum(
        jnp.dot(cast(x), cast(p["w1"]), preferred_element_type=jnp.float32) + p["b1"], 0.0)
    h = jnp.maximum(
        jnp.dot(cast(h), cast(p["w2"]), preferred_element_type=jnp.float32) + p["b2"], 0.0)
    h = jnp.maximum(
        jnp.dot(cast(h), cast(p["w3"]), preferred_element_type=jnp.float32) + p["b3"], 0.0)
    return jnp.dot(cast(h), cast(p["w4"]), preferred_element_type=jnp.float32) + p["b4"]


if __name__ == "__main__":
    window_size = 32
    batch = 16

    key = jax.random.PRNGKey(0)
    kx, kx2, kp = jax.random.split(key, 3)
    params = init_params(kp, window_size)

    # Small smoke test (single tile).
    x = jax.random.normal(kx, (batch, window_size), jnp.float32)
    out = jax.block_until_ready(vae_forward(x, params))
    assert out.shape == (batch, window_size)
    ref_mixed = vae_forward_ref(x, params, jnp.bfloat16)
    ref_f32 = vae_forward_ref(x, params, jnp.float32)
    assert jnp.allclose(out, ref_mixed, atol=1e-3, rtol=1e-3), "mismatch vs bf16 reference"
    assert jnp.allclose(out, ref_f32, atol=1e-1, rtol=1e-1), "mismatch vs f32 reference"

    # Non-divisible batch exercising batch padding + multi-step grid.
    x2 = jax.random.normal(kx2, (600, window_size), jnp.float32)
    out2 = jax.block_until_ready(vae_forward(x2, params, batch_tile=512))
    assert out2.shape == (600, window_size)
    ref2 = vae_forward_ref(x2, params, jnp.bfloat16)
    assert jnp.allclose(out2, ref2, atol=1e-3, rtol=1e-3), "mismatch vs bf16 reference (padded batch)"

    print("KERNEL_OK")
</pallas_src>

<mosaic_0001>
module attributes {stable_mosaic.version = 11 : i64} {
  func.func @vae_kernel(%arg0: i32, %arg1: memref<16x128xbf16, #tpu.memory_space<vmem>>, %arg2: memref<128x128xbf16, #tpu.memory_space<vmem>>, %arg3: memref<1x128xf32, #tpu.memory_space<vmem>>, %arg4: memref<128x128xbf16, #tpu.memory_space<vmem>>, %arg5: memref<1x128xf32, #tpu.memory_space<vmem>>, %arg6: memref<128x128xbf16, #tpu.memory_space<vmem>>, %arg7: memref<1x128xf32, #tpu.memory_space<vmem>>, %arg8: memref<128x128xbf16, #tpu.memory_space<vmem>>, %arg9: memref<1x128xf32, #tpu.memory_space<vmem>>, %arg10: memref<16x128xf32, #tpu.memory_space<vmem>>) attributes {dimension_semantics = [#tpu.dimension_semantics<parallel>], iteration_bounds = array<i64: 1>, scalar_prefetch = 0 : i64, scratch_operands = 0 : i64, tpu.core_type = #tpu.core_type<tc>, window_params = [{transform_indices = @transform_0, window_bounds = array<i64: 16, 128>}, {pipeline_mode = #tpu.pipeline_mode<synchronous>, transform_indices = @transform_1, window_bounds = array<i64: 128, 128>}, {pipeline_mode = #tpu.pipeline_mode<synchronous>, transform_indices = @transform_2, window_bounds = array<i64: 1, 128>}, {pipeline_mode = #tpu.pipeline_mode<synchronous>, transform_indices = @transform_3, window_bounds = array<i64: 128, 128>}, {pipeline_mode = #tpu.pipeline_mode<synchronous>, transform_indices = @transform_4, window_bounds = array<i64: 1, 128>}, {pipeline_mode = #tpu.pipeline_mode<synchronous>, transform_indices = @transform_5, window_bounds = array<i64: 128, 128>}, {pipeline_mode = #tpu.pipeline_mode<synchronous>, transform_indices = @transform_6, window_bounds = array<i64: 1, 128>}, {pipeline_mode = #tpu.pipeline_mode<synchronous>, transform_indices = @transform_7, window_bounds = array<i64: 128, 128>}, {pipeline_mode = #tpu.pipeline_mode<synchronous>, transform_indices = @transform_8, window_bounds = array<i64: 1, 128>}, {transform_indices = @transform_9, window_bounds = array<i64: 16, 128>}]} {
    %c0 = arith.constant 0 : index
    %c0_0 = arith.constant 0 : index
    %0 = vector.load %arg1[%c0, %c0_0] : memref<16x128xbf16, #tpu.memory_space<vmem>>, vector<16x128xbf16>
    %c0_1 = arith.constant 0 : index
    %c0_2 = arith.constant 0 : index
    %1 = vector.load %arg2[%c0_1, %c0_2] : memref<128x128xbf16, #tpu.memory_space<vmem>>, vector<128x128xbf16>
    %cst = arith.constant dense<0.000000e+00> : vector<16x128xf32>
    %2 = tpu.matmul %0, %1, %cst {dimension_numbers = #tpu.dot_dimension_numbers<[1], [0], [0], [1], [0, 0, 1, 1], [], []>} : vector<16x128xbf16>, vector<128x128xbf16>, vector<16x128xf32> -> vector<16x128xf32>
    %c0_3 = arith.constant 0 : index
    %c0_4 = arith.constant 0 : index
    %3 = vector.load %arg3[%c0_3, %c0_4] : memref<1x128xf32, #tpu.memory_space<vmem>>, vector<1x128xf32>
    %4 = vector.broadcast %3 : vector<1x128xf32> to vector<16x128xf32>
    %5 = arith.addf %2, %4 : vector<16x128xf32>
    %cst_5 = arith.constant 0.000000e+00 : f32
    %6 = vector.broadcast %cst_5 : f32 to vector<16x128xf32>
    %7 = arith.maximumf %5, %6 : vector<16x128xf32>
    %8 = arith.truncf %7 : vector<16x128xf32> to vector<16x128xbf16>
    %c0_6 = arith.constant 0 : index
    %c0_7 = arith.constant 0 : index
    %9 = vector.load %arg4[%c0_6, %c0_7] : memref<128x128xbf16, #tpu.memory_space<vmem>>, vector<128x128xbf16>
    %cst_8 = arith.constant dense<0.000000e+00> : vector<16x128xf32>
    %10 = tpu.matmul %8, %9, %cst_8 {dimension_numbers = #tpu.dot_dimension_numbers<[1], [0], [0], [1], [0, 0, 1, 1], [], []>} : vector<16x128xbf16>, vector<128x128xbf16>, vector<16x128xf32> -> vector<16x128xf32>
    %c0_9 = arith.constant 0 : index
    %c0_10 = arith.constant 0 : index
    %11 = vector.load %arg5[%c0_9, %c0_10] : memref<1x128xf32, #tpu.memory_space<vmem>>, vector<1x128xf32>
    %12 = vector.broadcast %11 : vector<1x128xf32> to vector<16x128xf32>
    %13 = arith.addf %10, %12 : vector<16x128xf32>
    %cst_11 = arith.constant 0.000000e+00 : f32
    %14 = vector.broadcast %cst_11 : f32 to vector<16x128xf32>
    %15 = arith.maximumf %13, %14 : vector<16x128xf32>
    %16 = arith.truncf %15 : vector<16x128xf32> to vector<16x128xbf16>
    %c0_12 = arith.constant 0 : index
    %c0_13 = arith.constant 0 : index
    %17 = vector.load %arg6[%c0_12, %c0_13] : memref<128x128xbf16, #tpu.memory_space<vmem>>, vector<128x128xbf16>
    %cst_14 = arith.constant dense<0.000000e+00> : vector<16x128xf32>
    %18 = tpu.matmul %16, %17, %cst_14 {dimension_numbers = #tpu.dot_dimension_numbers<[1], [0], [0], [1], [0, 0, 1, 1], [], []>} : vector<16x128xbf16>, vector<128x128xbf16>, vector<16x128xf32> -> vector<16x128xf32>
    %c0_15 = arith.constant 0 : index
    %c0_16 = arith.constant 0 : index
    %19 = vector.load %arg7[%c0_15, %c0_16] : memref<1x128xf32, #tpu.memory_space<vmem>>, vector<1x128xf32>
    %20 = vector.broadcast %19 : vector<1x128xf32> to vector<16x128xf32>
    %21 = arith.addf %18, %20 : vector<16x128xf32>
    %cst_17 = arith.constant 0.000000e+00 : f32
    %22 = vector.broadcast %cst_17 : f32 to vector<16x128xf32>
    %23 = arith.maximumf %21, %22 : vector<16x128xf32>
    %24 = arith.truncf %23 : vector<16x128xf32> to vector<16x128xbf16>
    %c0_18 = arith.constant 0 : index
    %c0_19 = arith.constant 0 : index
    %25 = vector.load %arg8[%c0_18, %c0_19] : memref<128x128xbf16, #tpu.memory_space<vmem>>, vector<128x128xbf16>
    %cst_20 = arith.constant dense<0.000000e+00> : vector<16x128xf32>
    %26 = tpu.matmul %24, %25, %cst_20 {dimension_numbers = #tpu.dot_dimension_numbers<[1], [0], [0], [1], [0, 0, 1, 1], [], []>} : vector<16x128xbf16>, vector<128x128xbf16>, vector<16x128xf32> -> vector<16x128xf32>
    %c0_21 = arith.constant 0 : index
    %c0_22 = arith.constant 0 : index
    %27 = vector.load %arg9[%c0_21, %c0_22] : memref<1x128xf32, #tpu.memory_space<vmem>>, vector<1x128xf32>
    %28 = vector.broadcast %27 : vector<1x128xf32> to vector<16x128xf32>
    %29 = arith.addf %26, %28 : vector<16x128xf32>
    %c0_23 = arith.constant 0 : index
    %c0_24 = arith.constant 0 : index
    %30 = vector.load %arg10[%c0_23, %c0_24] : memref<16x128xf32, #tpu.memory_space<vmem>>, vector<16x128xf32>
    tpu.vector_store %arg10[%c0_23, %c0_24], %29 {strides = array<i32>} : memref<16x128xf32, #tpu.memory_space<vmem>>, vector<16x128xf32>,
    return
  }
  func.func @transform_0(%arg0: i32) -> (i32, i32) {
    %c0_i32 = arith.constant 0 : i32
    %c0_i32_0 = arith.constant 0 : i32
    return %arg0, %c0_i32 : i32, i32
  }
  func.func @transform_1(%arg0: i32) -> (i32, i32) {
    %c0_i32 = arith.constant 0 : i32
    %c0_i32_0 = arith.constant 0 : i32
    %c0_i32_1 = arith.constant 0 : i32
    return %c0_i32, %c0_i32_0 : i32, i32
  }
  func.func @transform_2(%arg0: i32) -> (i32, i32) {
    %c0_i32 = arith.constant 0 : i32
    %c0_i32_0 = arith.constant 0 : i32
    %c0_i32_1 = arith.constant 0 : i32
    return %c0_i32, %c0_i32_0 : i32, i32
  }
  func.func @transform_3(%arg0: i32) -> (i32, i32) {
    %c0_i32 = arith.constant 0 : i32
    %c0_i32_0 = arith.constant 0 : i32
    %c0_i32_1 = arith.constant 0 : i32
    return %c0_i32, %c0_i32_0 : i32, i32
  }
  func.func @transform_4(%arg0: i32) -> (i32, i32) {
    %c0_i32 = arith.constant 0 : i32
    %c0_i32_0 = arith.constant 0 : i32
    %c0_i32_1 = arith.constant 0 : i32
    return %c0_i32, %c0_i32_0 : i32, i32
  }
  func.func @transform_5(%arg0: i32) -> (i32, i32) {
    %c0_i32 = arith.constant 0 : i32
    %c0_i32_0 = arith.constant 0 : i32
    %c0_i32_1 = arith.constant 0 : i32
    return %c0_i32, %c0_i32_0 : i32, i32
  }
  func.func @transform_6(%arg0: i32) -> (i32, i32) {
    %c0_i32 = arith.constant 0 : i32
    %c0_i32_0 = arith.constant 0 : i32
    %c0_i32_1 = arith.constant 0 : i32
    return %c0_i32, %c0_i32_0 : i32, i32
  }
  func.func @transform_7(%arg0: i32) -> (i32, i32) {
    %c0_i32 = arith.constant 0 : i32
    %c0_i32_0 = arith.constant 0 : i32
    %c0_i32_1 = arith.constant 0 : i32
    return %c0_i32, %c0_i32_0 : i32, i32
  }
  func.func @transform_8(%arg0: i32) -> (i32, i32) {
    %c0_i32 = arith.constant 0 : i32
    %c0_i32_0 = arith.constant 0 : i32
    %c0_i32_1 = arith.constant 0 : i32
    return %c0_i32, %c0_i32_0 : i32, i32
  }
  func.func @transform_9(%arg0: i32) -> (i32, i32) {
    %c0_i32 = arith.constant 0 : i32
    %c0_i32_0 = arith.constant 0 : i32
    return %arg0, %c0_i32 : i32, i32
  }
}

</mosaic_0001>

<llo_original>
// kernel: tpu_custom_call.1
$region0: #{tpu_custom_call.1}
  #allocation0 [shape = 'u32[]', space=smem, size = 0x4, offset = 0x4, fixed_abs, tag = 'smem constant byte address 0x4 - core index']
  #allocation1 [shape = 'u32[144,128]{1,0:T(1,128)}', space=vmem, size = 0x12000, scoped, tag = 'internal scratch']
  %s0 = inlined_call_operand.hbm [shape: bf16[16,128], index: 0, kind: input, shape index: {}]
  %s1 = inlined_call_operand.hbm [shape: bf16[128,128], index: 1, kind: input, shape index: {}]
  %s2 = inlined_call_operand.vmem [shape: f32[1,128], index: 2, kind: input, shape index: {}]
  %s3 = inlined_call_operand.hbm [shape: bf16[128,128], index: 3, kind: input, shape index: {}]
  %s4 = inlined_call_operand.vmem [shape: f32[1,128], index: 4, kind: input, shape index: {}]
  %s5 = inlined_call_operand.hbm [shape: bf16[128,128], index: 5, kind: input, shape index: {}]
  %s6 = inlined_call_operand.vmem [shape: f32[1,128], index: 6, kind: input, shape index: {}]
  %s7 = inlined_call_operand.hbm [shape: bf16[128,128], index: 7, kind: input, shape index: {}]
  %s8 = inlined_call_operand.vmem [shape: f32[1,128], index: 8, kind: input, shape index: {}]
  %s9 = inlined_call_operand.hbm [shape: f32[16,128], index: 9, kind: output, shape index: {}]
  %s10 = sld [smem:[#allocation0]]
  $region66: #{tpu_custom_call.1} parent=0
    _
  %s12 = ssub.s32 1, %s10
  %s13 = scalar_select 0, %s12, %s10
  $region1: #{tpu_custom_call.1} parent=0
    #allocation2 [shape = 'u8[4096]{0}', space=vmem, size = 0x1000, scoped, tag = 'input window, operand 0, single buffered']
    #allocation3 [shape = 's32[1]{0}', space=sflag, size = 0x4, scoped, tag = 'scoped memory for tpu_custom_call.1']
    #allocation4 [shape = 's32[1]{0}', space=sflag, size = 0x4, scoped, tag = 'scoped memory for tpu_custom_call.1']
    #allocation5 [shape = 'u8[32768]{0}', space=vmem, size = 0x8000, scoped, tag = 'input window, operand 1, single buffered']
    #allocation6 [shape = 's32[1]{0}', space=sflag, size = 0x4, scoped, tag = 'scoped memory for tpu_custom_call.1']
    #allocation7 [shape = 'u8[32768]{0}', space=vmem, size = 0x8000, scoped, tag = 'input window, operand 3, single buffered']
    #allocation8 [shape = 'u8[32768]{0}', space=vmem, size = 0x8000, scoped, tag = 'input window, operand 5, single buffered']
    #allocation9 [shape = 's32[1]{0}', space=sflag, size = 0x4, scoped, tag = 'scoped memory for tpu_custom_call.1']
    #allocation10 [shape = 'u8[32768]{0}', space=vmem, size = 0x8000, scoped, tag = 'input window, operand 7, single buffered']
    #allocation11 [shape = 'u8[8192]{0}', space=vmem, size = 0x2000, scoped, tag = 'output window, operand 0, single buffered']
    %14 = vsyncpa [#allocation3], 0
    %15 = vsyncpa [#allocation6], 0
    %16 = vsyncpa [#allocation9], 0
    %17 = vsyncpa [#allocation4], 0
    // Predicated region
    $region2: #{tpu_custom_call.1} parent=1 // pred_check
      _
    $region3: #{tpu_custom_call.1} parent=1 // pred_check_branch
      %19 = sbr.rel (0) target = $region5
    $region4: #{tpu_custom_call.1} parent=1 // pred_region
      %s21 = ssub.s32 128, 128
      %22 = vsyncadd [#allocation3], %s21
      %s23 = sshll.u32 [#allocation2], 4
      %s24 = int_to_ptr.vmem [resolvable:$true] %s23
      %29 = dma.hbm_to_vmem [thread:$0]  %s0, 128, %s24, [#allocation3], 64, 64, 4
    $region5: #{tpu_custom_call.1} parent=1 // pred_fallthru
      _
    // Predicated region
    $region6: #{tpu_custom_call.1} parent=1 // pred_check
      _
    $region7: #{tpu_custom_call.1} parent=1 // pred_check_branch
      %31 = sbr.rel (0) target = $region9
    $region8: #{tpu_custom_call.1} parent=1 // pred_region
      %s33 = ssub.s32 1024, 1024
      %34 = vsyncadd [#allocation6], %s33
      %s35 = sshll.u32 [#allocation5], 4
      %s36 = int_to_ptr.vmem [resolvable:$true] %s35
      %41 = dma.hbm_to_vmem [thread:$0]  %s1, 1024, %s36, [#allocation6], 64, 64, 4
    $region9: #{tpu_custom_call.1} parent=1 // pred_fallthru
      _
    // Predicated region
    $region10: #{tpu_custom_call.1} parent=1 // pred_check
      _
    $region11: #{tpu_custom_call.1} parent=1 // pred_check_branch
      %43 = sbr.rel (0) target = $region13
    $region12: #{tpu_custom_call.1} parent=1 // pred_region
      _
    $region13: #{tpu_custom_call.1} parent=1 // pred_fallthru
      _
    // Predicated region
    $region14: #{tpu_custom_call.1} parent=1 // pred_check
      _
    $region15: #{tpu_custom_call.1} parent=1 // pred_check_branch
      %45 = sbr.rel (0) target = $region17
    $region16: #{tpu_custom_call.1} parent=1 // pred_region
      %s47 = ssub.s32 1024, 1024
      %48 = vsyncadd [#allocation6], %s47
      %s49 = sshll.u32 [#allocation7], 4
      %s50 = int_to_ptr.vmem [resolvable:$true] %s49
      %55 = dma.hbm_to_vmem [thread:$0]  %s3, 1024, %s50, [#allocation6], 64, 64, 4
    $region17: #{tpu_custom_call.1} parent=1 // pred_fallthru
      _
    // Predicated region
    $region18: #{tpu_custom_call.1} parent=1 // pred_check
      _
    $region19: #{tpu_custom_call.1} parent=1 // pred_check_branch
      %57 = sbr.rel (0) target = $region21
    $region20: #{tpu_custom_call.1} parent=1 // pred_region
      _
    $region21: #{tpu_custom_call.1} parent=1 // pred_fallthru
      _
    // Predicated region
    $region22: #{tpu_custom_call.1} parent=1 // pred_check
      _
    $region23: #{tpu_custom_call.1} parent=1 // pred_check_branch
      %59 = sbr.rel (0) target = $region25
    $region24: #{tpu_custom_call.1} parent=1 // pred_region
      %s61 = ssub.s32 1024, 1024
      %62 = vsyncadd [#allocation9], %s61
      %s63 = sshll.u32 [#allocation8], 4
      %s64 = int_to_ptr.vmem [resolvable:$true] %s63
      %69 = dma.hbm_to_vmem [thread:$0]  %s5, 1024, %s64, [#allocation9], 64, 64, 4
    $region25: #{tpu_custom_call.1} parent=1 // pred_fallthru
      _
    // Predicated region
    $region26: #{tpu_custom_call.1} parent=1 // pred_check
      _
    $region27: #{tpu_custom_call.1} parent=1 // pred_check_branch
      %71 = sbr.rel (0) target = $region29
    $region28: #{tpu_custom_call.1} parent=1 // pred_region
      _
    $region29: #{tpu_custom_call.1} parent=1 // pred_fallthru
      _
    // Predicated region
    $region30: #{tpu_custom_call.1} parent=1 // pred_check
      _
    $region31: #{tpu_custom_call.1} parent=1 // pred_check_branch
      %73 = sbr.rel (0) target = $region33
    $region32: #{tpu_custom_call.1} parent=1 // pred_region
      %s75 = ssub.s32 1024, 1024
      %76 = vsyncadd [#allocation9], %s75
      %s77 = sshll.u32 [#allocation10], 4
      %s78 = int_to_ptr.vmem [resolvable:$true] %s77
      %83 = dma.hbm_to_vmem [thread:$0]  %s7, 1024, %s78, [#allocation9], 64, 64, 4
    $region33: #{tpu_custom_call.1} parent=1 // pred_fallthru
      _
    // Predicated region
    $region34: #{tpu_custom_call.1} parent=1 // pred_check
      _
    $region35: #{tpu_custom_call.1} parent=1 // pred_check_branch
      %85 = sbr.rel (0) target = $region37
    $region36: #{tpu_custom_call.1} parent=1 // pred_region
      _
    $region37: #{tpu_custom_call.1} parent=1 // pred_fallthru
      _
    // Predicated region
    $region38: #{tpu_custom_call.1} parent=1 // pred_check
      _
    $region39: #{tpu_custom_call.1} parent=1 // pred_check_branch
      %87 = sbr.rel (0) target = $region41
    $region40: #{tpu_custom_call.1} parent=1 // pred_region
      %88 = dma.done [#allocation3], 128
    $region41: #{tpu_custom_call.1} parent=1 // pred_fallthru
      _
    // Predicated region
    $region42: #{tpu_custom_call.1} parent=1 // pred_check
      _
    $region43: #{tpu_custom_call.1} parent=1 // pred_check_branch
      %90 = sbr.rel (0) target = $region45
    $region44: #{tpu_custom_call.1} parent=1 // pred_region
      %91 = dma.done [#allocation6], 1024
    $region45: #{tpu_custom_call.1} parent=1 // pred_fallthru
      _
    // Predicated region
    $region46: #{tpu_custom_call.1} parent=1 // pred_check
      _
    $region47: #{tpu_custom_call.1} parent=1 // pred_check_branch
      %93 = sbr.rel (0) target = $region49
    $region48: #{tpu_custom_call.1} parent=1 // pred_region
      %94 = dma.done [#allocation6], 1024
    $region49: #{tpu_custom_call.1} parent=1 // pred_fallthru
      _
    // Predicated region
    $region50: #{tpu_custom_call.1} parent=1 // pred_check
      _
    $region51: #{tpu_custom_call.1} parent=1 // pred_check_branch
      %96 = sbr.rel (0) target = $region53
    $region52: #{tpu_custom_call.1} parent=1 // pred_region
      %97 = dma.done [#allocation9], 1024
    $region53: #{tpu_custom_call.1} parent=1 // pred_fallthru
      _
    // Predicated region
    $region54: #{tpu_custom_call.1} parent=1 // pred_check
      _
    $region55: #{tpu_custom_call.1} parent=1 // pred_check_branch
      %99 = sbr.rel (0) target = $region57
    $region56: #{tpu_custom_call.1} parent=1 // pred_region
      %100 = dma.done [#allocation9], 1024
    $region57: #{tpu_custom_call.1} parent=1 // pred_fallthru
      _
    %v102 = vld [vmem:[#allocation2] sm:$0xf]
    %v103 = vld [vmem:[#allocation2 + $0x4] sm:$0xf]
    %v104 = vld [vmem:[#allocation5] sm:$0xf]
    %v105 = vld [vmem:[#allocation5 + $0x4] sm:$0xf]
    %v106 = vld [vmem:[#allocation5 + $0x8] sm:$0xf]
    %v107 = vld [vmem:[#allocation5 + $0xc] sm:$0xf]
    %v108 = vld [vmem:[#allocation5 + $0x10] sm:$0xf]
    %v109 = vld [vmem:[#allocation5 + $0x14] sm:$0xf]
    %v110 = vld [vmem:[#allocation5 + $0x18] sm:$0xf]
    %v111 = vld [vmem:[#allocation5 + $0x1c] sm:$0xf]
    %v112 = vld [vmem:[#allocation5 + $0x20] sm:$0xf]
    %v113 = vld [vmem:[#allocation5 + $0x24] sm:$0xf]
    %v114 = vld [vmem:[#allocation5 + $0x28] sm:$0xf]
    %v115 = vld [vmem:[#allocation5 + $0x2c] sm:$0xf]
    %v116 = vld [vmem:[#allocation5 + $0x30] sm:$0xf]
    %v117 = vld [vmem:[#allocation5 + $0x34] sm:$0xf]
    %v118 = vld [vmem:[#allocation5 + $0x38] sm:$0xf]
    %v119 = vld [vmem:[#allocation5 + $0x3c] sm:$0xf]
    %v120 = vld [vmem:[%s2] sm:$0x1]
    %v122 = vlaneseq
    %v123 = vshrl.u32 %v122, 7
    %v124 = vsub.s32 0, %v123
    %v125 = vrot.slane %v120, %v124
    %v129 = vunpack.c.l.b16 %v102
    %v130 = vunpack.c.l.b16 %v103
    %v131 = vpack.c.b16 %v130, %v129
    %v149 = vunpack.c.l.b16 %v104
    %v150 = vunpack.c.l.b16 %v105
    %v151 = vunpack.c.l.b16 %v106
    %v152 = vunpack.c.l.b16 %v107
    %v153 = vunpack.c.l.b16 %v108
    %v154 = vunpack.c.l.b16 %v109
    %v155 = vunpack.c.l.b16 %v110
    %v156 = vunpack.c.l.b16 %v111
    %v157 = vunpack.c.l.b16 %v112
    %v158 = vunpack.c.l.b16 %v113
    %v159 = vunpack.c.l.b16 %v114
    %v160 = vunpack.c.l.b16 %v115
    %v161 = vunpack.c.l.b16 %v116
    %v162 = vunpack.c.l.b16 %v117
    %v163 = vunpack.c.l.b16 %v118
    %v164 = vunpack.c.l.b16 %v119
    %v165 = vpack.c.b16 %v150, %v149
    %v166 = vpack.c.b16 %v152, %v151
    %v167 = vpack.c.b16 %v154, %v153
    %v168 = vpack.c.b16 %v156, %v155
    %v169 = vpack.c.b16 %v158, %v157
    %v170 = vpack.c.b16 %v160, %v159
    %v171 = vpack.c.b16 %v162, %v161
    %v172 = vpack.c.b16 %v164, %v163
    %181 = vmatprep.subr.bf16.mxu0 0
    %182 = vmatpush1.bf16.msra.mxu0 %v165
    %183 = vmatprep.subr.bf16.mxu0 0
    %184 = vmatpush1.bf16.msra.mxu0 %v166
    %185 = vmatprep.subr.bf16.mxu0 0
    %186 = vmatpush1.bf16.msra.mxu0 %v167
    %187 = vmatprep.subr.bf16.mxu0 0
    %188 = vmatpush1.bf16.msra.mxu0 %v168
    %189 = vmatprep.subr.bf16.mxu0 0
    %190 = vmatpush1.bf16.msra.mxu0 %v169
    %191 = vmatprep.subr.bf16.mxu0 0
    %192 = vmatpush1.bf16.msra.mxu0 %v170
    %193 = vmatprep.subr.bf16.mxu0 0
    %194 = vmatpush1.bf16.msra.mxu0 %v171
    %195 = vmatprep.subr.bf16.mxu0 0
    %196 = vmatpush1.bf16.msra.mxu0 %v172
    %197 = vmatprep.subr.bf16.mxu0 0
    %198 = vmatpush1.bf16.msra.mxu0 0
    %199 = vmatprep.subr.bf16.mxu0 0
    %200 = vmatpush1.bf16.msra.mxu0 0
    %201 = vmatprep.subr.bf16.mxu0 0
    %202 = vmatpush1.bf16.msra.mxu0 0
    %203 = vmatprep.subr.bf16.mxu0 0
    %204 = vmatpush1.bf16.msra.mxu0 0
    %205 = vmatprep.subr.bf16.mxu0 0
    %206 = vmatpush1.bf16.msra.mxu0 0
    %207 = vmatprep.subr.bf16.mxu0 0
    %208 = vmatpush1.bf16.msra.mxu0 0
    %209 = vmatprep.subr.bf16.mxu0 0
    %210 = vmatpush1.bf16.msra.mxu0 0
    %211 = vmatprep.subr.bf16.mxu0 0
    %212 = vmatpush1.bf16.msra.mxu0 0
    %213 = vmatprep.mubr.bf16.mxu0 0
    %214 = vmatmul.mubr.bf16.gmra.mrb[0].mxu0 %v131
    %v215 = vpop.f32.mrb[0].mxu0
    %v216 = vadd.f32 %v125, %v215
    %v217 = vpop.f32.mrb[0].mxu0
    %v218 = vpop.f32.mrb[0].mxu0
    %v219 = vadd.f32 %v125, %v218
    %v220 = vpop.f32.mrb[0].mxu0
    %221 = vdwg.mxu0
    %v222 = vmax.f32 %v216, 0.0
    %v223 = vmax.f32 %v219, 0.0
    %v224 = vpack.c.bf16 %v223, %v222
    %v225 = vld [vmem:[#allocation7] sm:$0xf]
    %v226 = vld [vmem:[#allocation7 + $0x4] sm:$0xf]
    %v227 = vld [vmem:[#allocation7 + $0x8] sm:$0xf]
    %v228 = vld [vmem:[#allocation7 + $0xc] sm:$0xf]
    %v229 = vld [vmem:[#allocation7 + $0x10] sm:$0xf]
    %v230 = vld [vmem:[#allocation7 + $0x14] sm:$0xf]
    %v231 = vld [vmem:[#allocation7 + $0x18] sm:$0xf]
    %v232 = vld [vmem:[#allocation7 + $0x1c] sm:$0xf]
    %v233 = vld [vmem:[#allocation7 + $0x20] sm:$0xf]
    %v234 = vld [vmem:[#allocation7 + $0x24] sm:$0xf]
    %v235 = vld [vmem:[#allocation7 + $0x28] sm:$0xf]
    %v236 = vld [vmem:[#allocation7 + $0x2c] sm:$0xf]
    %v237 = vld [vmem:[#allocation7 + $0x30] sm:$0xf]
    %v238 = vld [vmem:[#allocation7 + $0x34] sm:$0xf]
    %v239 = vld [vmem:[#allocation7 + $0x38] sm:$0xf]
    %v240 = vld [vmem:[#allocation7 + $0x3c] sm:$0xf]
    %v241 = vld [vmem:[%s4] sm:$0x1]
    %v243 = vlaneseq
    %v244 = vshrl.u32 %v243, 7
    %v245 = vsub.s32 0, %v244
    %v246 = vrot.slane %v241, %v245
    %v264 = vunpack.c.l.b16 %v225
    %v265 = vunpack.c.l.b16 %v226
    %v266 = vunpack.c.l.b16 %v227
    %v267 = vunpack.c.l.b16 %v228
    %v268 = vunpack.c.l.b16 %v229
    %v269 = vunpack.c.l.b16 %v230
    %v270 = vunpack.c.l.b16 %v231
    %v271 = vunpack.c.l.b16 %v232
    %v272 = vunpack.c.l.b16 %v233
    %v273 = vunpack.c.l.b16 %v234
    %v274 = vunpack.c.l.b16 %v235
    %v275 = vunpack.c.l.b16 %v236
    %v276 = vunpack.c.l.b16 %v237
    %v277 = vunpack.c.l.b16 %v238
    %v278 = vunpack.c.l.b16 %v239
    %v279 = vunpack.c.l.b16 %v240
    %v280 = vpack.c.b16 %v265, %v264
    %v281 = vpack.c.b16 %v267, %v266
    %v282 = vpack.c.b16 %v269, %v268
    %v283 = vpack.c.b16 %v271, %v270
    %v284 = vpack.c.b16 %v273, %v272
    %v285 = vpack.c.b16 %v275, %v274
    %v286 = vpack.c.b16 %v277, %v276
    %v287 = vpack.c.b16 %v279, %v278
    %296 = vmatprep.subr.bf16.mxu0 0
    %297 = vmatpush1.bf16.msra.mxu0 %v280
    %298 = vmatprep.subr.bf16.mxu0 0
    %299 = vmatpush1.bf16.msra.mxu0 %v281
    %300 = vmatprep.subr.bf16.mxu0 0
    %301 = vmatpush1.bf16.msra.mxu0 %v282
    %302 = vmatprep.subr.bf16.mxu0 0
    %303 = vmatpush1.bf16.msra.mxu0 %v283
    %304 = vmatprep.subr.bf16.mxu0 0
    %305 = vmatpush1.bf16.msra.mxu0 %v284
    %306 = vmatprep.subr.bf16.mxu0 0
    %307 = vmatpush1.bf16.msra.mxu0 %v285
    %308 = vmatprep.subr.bf16.mxu0 0
    %309 = vmatpush1.bf16.msra.mxu0 %v286
    %310 = vmatprep.subr.bf16.mxu0 0
    %311 = vmatpush1.bf16.msra.mxu0 %v287
    %312 = vmatprep.subr.bf16.mxu0 0
    %313 = vmatpush1.bf16.msra.mxu0 0
    %314 = vmatprep.subr.bf16.mxu0 0
    %315 = vmatpush1.bf16.msra.mxu0 0
    %316 = vmatprep.subr.bf16.mxu0 0
    %317 = vmatpush1.bf16.msra.mxu0 0
    %318 = vmatprep.subr.bf16.mxu0 0
    %319 = vmatpush1.bf16.msra.mxu0 0
    %320 = vmatprep.subr.bf16.mxu0 0
    %321 = vmatpush1.bf16.msra.mxu0 0
    %322 = vmatprep.subr.bf16.mxu0 0
    %323 = vmatpush1.bf16.msra.mxu0 0
    %324 = vmatprep.subr.bf16.mxu0 0
    %325 = vmatpush1.bf16.msra.mxu0 0
    %326 = vmatprep.subr.bf16.mxu0 0
    %327 = vmatpush1.bf16.msra.mxu0 0
    %328 = vmatprep.mubr.bf16.mxu0 0
    %329 = vmatmul.mubr.bf16.gmra.mrb[0].mxu0 %v224
    %v330 = vpop.f32.mrb[0].mxu0
    %v331 = vadd.f32 %v246, %v330
    %v332 = vpop.f32.mrb[0].mxu0
    %v333 = vpop.f32.mrb[0].mxu0
    %v334 = vadd.f32 %v246, %v333
    %v335 = vpop.f32.mrb[0].mxu0
    %336 = vdwg.mxu0
    %v337 = vmax.f32 %v331, 0.0
    %v338 = vmax.f32 %v334, 0.0
    %v339 = vpack.c.bf16 %v338, %v337
    %v340 = vld [vmem:[#allocation8] sm:$0xf]
    %v341 = vld [vmem:[#allocation8 + $0x4] sm:$0xf]
    %v342 = vld [vmem:[#allocation8 + $0x8] sm:$0xf]
    %v343 = vld [vmem:[#allocation8 + $0xc] sm:$0xf]
    %v344 = vld [vmem:[#allocation8 + $0x10] sm:$0xf]
    %v345 = vld [vmem:[#allocation8 + $0x14] sm:$0xf]
    %v346 = vld [vmem:[#allocation8 + $0x18] sm:$0xf]
    %v347 = vld [vmem:[#allocation8 + $0x1c] sm:$0xf]
    %v348 = vld [vmem:[#allocation8 + $0x20] sm:$0xf]
    %v349 = vld [vmem:[#allocation8 + $0x24] sm:$0xf]
    %v350 = vld [vmem:[#allocation8 + $0x28] sm:$0xf]
    %v351 = vld [vmem:[#allocation8 + $0x2c] sm:$0xf]
    %v352 = vld [vmem:[#allocation8 + $0x30] sm:$0xf]
    %v353 = vld [vmem:[#allocation8 + $0x34] sm:$0xf]
    %v354 = vld [vmem:[#allocation8 + $0x38] sm:$0xf]
    %v355 = vld [vmem:[#allocation8 + $0x3c] sm:$0xf]
    %v356 = vld [vmem:[%s6] sm:$0x1]
    %v358 = vlaneseq
    %v359 = vshrl.u32 %v358, 7
    %v360 = vsub.s32 0, %v359
    %v361 = vrot.slane %v356, %v360
    %v379 = vunpack.c.l.b16 %v340
    %v380 = vunpack.c.l.b16 %v341
    %v381 = vunpack.c.l.b16 %v342
    %v382 = vunpack.c.l.b16 %v343
    %v383 = vunpack.c.l.b16 %v344
    %v384 = vunpack.c.l.b16 %v345
    %v385 = vunpack.c.l.b16 %v346
    %v386 = vunpack.c.l.b16 %v347
    %v387 = vunpack.c.l.b16 %v348
    %v388 = vunpack.c.l.b16 %v349
    %v389 = vunpack.c.l.b16 %v350
    %v390 = vunpack.c.l.b16 %v351
    %v391 = vunpack.c.l.b16 %v352
    %v392 = vunpack.c.l.b16 %v353
    %v393 = vunpack.c.l.b16 %v354
    %v394 = vunpack.c.l.b16 %v355
    %v395 = vpack.c.b16 %v380, %v379
    %v396 = vpack.c.b16 %v382, %v381
    %v397 = vpack.c.b16 %v384, %v383
    %v398 = vpack.c.b16 %v386, %v385
    %v399 = vpack.c.b16 %v388, %v387
    %v400 = vpack.c.b16 %v390, %v389
    %v401 = vpack.c.b16 %v392, %v391
    %v402 = vpack.c.b16 %v394, %v393
    %411 = vmatprep.subr.bf16.mxu0 0
    %412 = vmatpush1.bf16.msra.mxu0 %v395
    %413 = vmatprep.subr.bf16.mxu0 0
    %414 = vmatpush1.bf16.msra.mxu0 %v396
    %415 = vmatprep.subr.bf16.mxu0 0
    %416 = vmatpush1.bf16.msra.mxu0 %v397
    %417 = vmatprep.subr.bf16.mxu0 0
    %418 = vmatpush1.bf16.msra.mxu0 %v398
    %419 = vmatprep.subr.bf16.mxu0 0
    %420 = vmatpush1.bf16.msra.mxu0 %v399
    %421 = vmatprep.subr.bf16.mxu0 0
    %422 = vmatpush1.bf16.msra.mxu0 %v400
    %423 = vmatprep.subr.bf16.mxu0 0
    %424 = vmatpush1.bf16.msra.mxu0 %v401
    %425 = vmatprep.subr.bf16.mxu0 0
    %426 = vmatpush1.bf16.msra.mxu0 %v402
    %427 = vmatprep.subr.bf16.mxu0 0
    %428 = vmatpush1.bf16.msra.mxu0 0
    %429 = vmatprep.subr.bf16.mxu0 0
    %430 = vmatpush1.bf16.msra.mxu0 0
    %431 = vmatprep.subr.bf16.mxu0 0
    %432 = vmatpush1.bf16.msra.mxu0 0
    %433 = vmatprep.subr.bf16.mxu0 0
    %434 = vmatpush1.bf16.msra.mxu0 0
    %435 = vmatprep.subr.bf16.mxu0 0
    %436 = vmatpush1.bf16.msra.mxu0 0
    %437 = vmatprep.subr.bf16.mxu0 0
    %438 = vmatpush1.bf16.msra.mxu0 0
    %439 = vmatprep.subr.bf16.mxu0 0
    %440 = vmatpush1.bf16.msra.mxu0 0
    %441 = vmatprep.subr.bf16.mxu0 0
    %442 = vmatpush1.bf16.msra.mxu0 0
    %443 = vmatprep.mubr.bf16.mxu0 0
    %444 = vmatmul.mubr.bf16.gmra.mrb[0].mxu0 %v339
    %v445 = vpop.f32.mrb[0].mxu0
    %v446 = vadd.f32 %v361, %v445
    %v447 = vpop.f32.mrb[0].mxu0
    %v448 = vpop.f32.mrb[0].mxu0
    %v449 = vadd.f32 %v361, %v448
    %v450 = vpop.f32.mrb[0].mxu0
    %451 = vdwg.mxu0
    %v452 = vmax.f32 %v446, 0.0
    %v453 = vmax.f32 %v449, 0.0
    %v454 = vpack.c.bf16 %v453, %v452
    %v455 = vld [vmem:[#allocation10] sm:$0xf]
    %v456 = vld [vmem:[#allocation10 + $0x4] sm:$0xf]
    %v457 = vld [vmem:[#allocation10 + $0x8] sm:$0xf]
    %v458 = vld [vmem:[#allocation10 + $0xc] sm:$0xf]
    %v459 = vld [vmem:[#allocation10 + $0x10] sm:$0xf]
    %v460 = vld [vmem:[#allocation10 + $0x14] sm:$0xf]
    %v461 = vld [vmem:[#allocation10 + $0x18] sm:$0xf]
    %v462 = vld [vmem:[#allocation10 + $0x1c] sm:$0xf]
    %v463 = vld [vmem:[#allocation10 + $0x20] sm:$0xf]
    %v464 = vld [vmem:[#allocation10 + $0x24] sm:$0xf]
    %v465 = vld [vmem:[#allocation10 + $0x28] sm:$0xf]
    %v466 = vld [vmem:[#allocation10 + $0x2c] sm:$0xf]
    %v467 = vld [vmem:[#allocation10 + $0x30] sm:$0xf]
    %v468 = vld [vmem:[#allocation10 + $0x34] sm:$0xf]
    %v469 = vld [vmem:[#allocation10 + $0x38] sm:$0xf]
    %v470 = vld [vmem:[#allocation10 + $0x3c] sm:$0xf]
    %v471 = vld [vmem:[%s8] sm:$0x1]
    %v473 = vlaneseq
    %v474 = vshrl.u32 %v473, 7
    %v475 = vsub.s32 0, %v474
    %v476 = vrot.slane %v471, %v475
    %v494 = vunpack.c.l.b16 %v455
    %v495 = vunpack.c.l.b16 %v456
    %v496 = vunpack.c.l.b16 %v457
    %v497 = vunpack.c.l.b16 %v458
    %v498 = vunpack.c.l.b16 %v459
    %v499 = vunpack.c.l.b16 %v460
    %v500 = vunpack.c.l.b16 %v461
    %v501 = vunpack.c.l.b16 %v462
    %v502 = vunpack.c.l.b16 %v463
    %v503 = vunpack.c.l.b16 %v464
    %v504 = vunpack.c.l.b16 %v465
    %v505 = vunpack.c.l.b16 %v466
    %v506 = vunpack.c.l.b16 %v467
    %v507 = vunpack.c.l.b16 %v468
    %v508 = vunpack.c.l.b16 %v469
    %v509 = vunpack.c.l.b16 %v470
    %v510 = vpack.c.b16 %v495, %v494
    %v511 = vpack.c.b16 %v497, %v496
    %v512 = vpack.c.b16 %v499, %v498
    %v513 = vpack.c.b16 %v501, %v500
    %v514 = vpack.c.b16 %v503, %v502
    %v515 = vpack.c.b16 %v505, %v504
    %v516 = vpack.c.b16 %v507, %v506
    %v517 = vpack.c.b16 %v509, %v508
    %526 = vmatprep.subr.bf16.mxu0 0
    %527 = vmatpush1.bf16.msra.mxu0 %v510
    %528 = vmatprep.subr.bf16.mxu0 0
    %529 = vmatpush1.bf16.msra.mxu0 %v511
    %530 = vmatprep.subr.bf16.mxu0 0
    %531 = vmatpush1.bf16.msra.mxu0 %v512
    %532 = vmatprep.subr.bf16.mxu0 0
    %533 = vmatpush1.bf16.msra.mxu0 %v513
    %534 = vmatprep.subr.bf16.mxu0 0
    %535 = vmatpush1.bf16.msra.mxu0 %v514
    %536 = vmatprep.subr.bf16.mxu0 0
    %537 = vmatpush1.bf16.msra.mxu0 %v515
    %538 = vmatprep.subr.bf16.mxu0 0
    %539 = vmatpush1.bf16.msra.mxu0 %v516
    %540 = vmatprep.subr.bf16.mxu0 0
    %541 = vmatpush1.bf16.msra.mxu0 %v517
    %542 = vmatprep.subr.bf16.mxu0 0
    %543 = vmatpush1.bf16.msra.mxu0 0
    %544 = vmatprep.subr.bf16.mxu0 0
    %545 = vmatpush1.bf16.msra.mxu0 0
    %546 = vmatprep.subr.bf16.mxu0 0
    %547 = vmatpush1.bf16.msra.mxu0 0
    %548 = vmatprep.subr.bf16.mxu0 0
    %549 = vmatpush1.bf16.msra.mxu0 0
    %550 = vmatprep.subr.bf16.mxu0 0
    %551 = vmatpush1.bf16.msra.mxu0 0
    %552 = vmatprep.subr.bf16.mxu0 0
    %553 = vmatpush1.bf16.msra.mxu0 0
    %554 = vmatprep.subr.bf16.mxu0 0
    %555 = vmatpush1.bf16.msra.mxu0 0
    %556 = vmatprep.subr.bf16.mxu0 0
    %557 = vmatpush1.bf16.msra.mxu0 0
    %558 = vmatprep.mubr.bf16.mxu0 0
    %559 = vmatmul.mubr.bf16.gmra.mrb[0].mxu0 %v454
    %v560 = vpop.f32.mrb[0].mxu0
    %v561 = vadd.f32 %v476, %v560
    %v562 = vpop.f32.mrb[0].mxu0
    %v563 = vpop.f32.mrb[0].mxu0
    %v564 = vadd.f32 %v476, %v563
    %v565 = vpop.f32.mrb[0].mxu0
    %566 = vdwg.mxu0
    %567 = vst [vmem:[#allocation11] sm:$0xff] %v561
    %568 = vst [vmem:[#allocation11 + $0x8] sm:$0xff] %v564
    // Predicated region
    $region58: #{tpu_custom_call.1} parent=1 // pred_check
      _
    $region59: #{tpu_custom_call.1} parent=1 // pred_check_branch
      %570 = sbr.rel (0) target = $region61
    $region60: #{tpu_custom_call.1} parent=1 // pred_region
      %s572 = ssub.s32 256, 256
      %573 = vsyncadd [#allocation4], %s572
      %s574 = sshll.u32 [#allocation11], 4
      %s575 = int_to_ptr.vmem [resolvable:$true] %s574
      %580 = dma.vmem_to_hbm [thread:$0]  %s575, 256, %s9, [#allocation4], 128, 128, 8
    $region61: #{tpu_custom_call.1} parent=1 // pred_fallthru
      _
    // Predicated region
    $region62: #{tpu_custom_call.1} parent=1 // pred_check
      _
    $region63: #{tpu_custom_call.1} parent=1 // pred_check_branch
      %582 = sbr.rel (0) target = $region65
    $region64: #{tpu_custom_call.1} parent=1 // pred_region
      %583 = dma.done [#allocation4], 256
    $region65: #{tpu_custom_call.1} parent=1 // pred_fallthru
      _
    %584 = vsyncpa [#allocation3], 1
    %585 = vsyncpa [#allocation6], 1
    %586 = vsyncpa [#allocation9], 1
    %587 = vsyncpa [#allocation4], 1

</llo_original>
